<compile_context>
chip_gen: v7x
topology: tpu7x:2x2x1
jax: 0.10.0
libtpu: 0.0.40
codegen_flags: <defaults>
</compile_context>

<pallas_src>
import functools

import jax
import jax.numpy as jnp
from jax import lax
from jax.experimental import pallas as pl
from jax.experimental.pallas import tpu as pltpu

# Logical dims 10 -> 240 -> 120 -> 2; hidden dims padded to lane-friendly widths.
F_IN = 10
H1, H1_PAD = 240, 256
H2, H2_PAD = 120, 128
F_OUT = 2


def mlp_kernel(x_ref, w1_ref, t1_ref, w2_ref, t2_ref, w3_ref, t3_ref, o_ref, *, chunk):
    n_chunks = x_ref.shape[0] // chunk

    def body(i, carry):
        r0 = pl.multiple_of(i * chunk, chunk)
        xb = x_ref[pl.ds(r0, chunk), :].astype(jnp.bfloat16)   # cast inside kernel
        # layer 1: linear (+ folded BN) + dropout(identity) + ReLU
        h = jnp.dot(xb, w1_ref[...], preferred_element_type=jnp.float32)
        h = jnp.maximum(h + t1_ref[...], 0.0)
        # layer 2: linear (+ folded BN) + dropout(identity) + ReLU
        h = jnp.dot(h.astype(jnp.bfloat16), w2_ref[...],
                    preferred_element_type=jnp.float32)
        h = jnp.maximum(h + t2_ref[...], 0.0)
        # layer 3: linear (+ folded BN3) + Tanh -- only the 2 valid columns
        h = jnp.dot(h.astype(jnp.bfloat16), w3_ref[...],
                    preferred_element_type=jnp.float32)
        o_ref[pl.ds(r0, chunk), :] = jnp.tanh(h + t3_ref[...])
        return carry

    lax.fori_loop(0, n_chunks, body, 0)


def make_params(key):
    """Deterministic nn.Linear / nn.BatchNorm1d-shaped params, BN-folded and padded."""
    dims = [(F_IN, H1), (H1, H2), (H2, F_OUT)]
    pads = [(F_IN, H1_PAD), (H1_PAD, H2_PAD), (H2_PAD, F_OUT)]   # output NOT padded
    params = {}
    keys = jax.random.split(key, 12)
    ki = 0
    for li, ((fin, fout), (fin_p, fout_p)) in enumerate(zip(dims, pads), start=1):
        bound = 1.0 / jnp.sqrt(jnp.float32(fin))
        # PyTorch stores weight as (fout, fin); we keep the transposed (fin, fout) layout.
        w = jax.random.uniform(keys[ki], (fin, fout), jnp.float32, -bound, bound); ki += 1
        b = jax.random.uniform(keys[ki], (1, fout), jnp.float32, -bound, bound); ki += 1
        gamma = 1.0 + 0.1 * jax.random.normal(keys[ki], (1, fout), jnp.float32); ki += 1
        beta = 0.1 * jax.random.normal(keys[ki], (1, fout), jnp.float32); ki += 1
        run_mean = 0.1 * jnp.arange(fout, dtype=jnp.float32).reshape(1, fout) / fout
        run_var = 1.0 + 0.05 * jnp.arange(fout, dtype=jnp.float32).reshape(1, fout) / fout
        eps = 1e-5
        scale = gamma / jnp.sqrt(run_var + eps)
        w_fold = w * scale                                  # scale output columns
        t_fold = b * scale + (beta - run_mean * scale)      # folded bias + BN shift
        # Zero-padding: padded cols give relu(0)=0, padded rows are zero weights,
        # so padding never changes the logical output.
        w_pad = jnp.zeros((fin_p, fout_p), jnp.float32).at[:fin, :fout].set(w_fold)
        t_pad = jnp.zeros((1, fout_p), jnp.float32).at[:, :fout].set(t_fold)
        params[f"w{li}"] = w_pad.astype(jnp.bfloat16)        # bf16 weights (MXU native)
        params[f"t{li}"] = t_pad                             # f32 shift (f32 epilogue)
    return params


def _round_up(n, m):
    return ((n + m - 1) // m) * m


def _choose_tiles(batch, *, max_block=8192, chunk=512):
    """Pick (block_b, chunk): big DMA tiles, bounded live intermediates, >=2 grid steps."""
    if batch <= chunk:
        return batch, batch                      # one grid step covering the whole batch
    block = min(max_block, _round_up(pl.cdiv(batch, 2), chunk))
    return block, chunk


@functools.partial(jax.jit, static_argnames=("block_b", "chunk"))
def _mlp_call(x, w1, t1, w2, t2, w3, t3, *, block_b, chunk):
    B = x.shape[0]
    grid = (pl.cdiv(B, block_b),)

    def resident(shape):
        # Weights / shifts stay VMEM-resident across all batch tiles (constant index_map).
        return pl.BlockSpec(shape, lambda i: (0, 0))

    kernel = functools.partial(mlp_kernel, chunk=chunk)
    return pl.pallas_call(
        kernel,
        out_shape=jax.ShapeDtypeStruct((B, F_OUT), jnp.float32),
        grid=grid,
        in_specs=[
            pl.BlockSpec((block_b, F_IN), lambda i: (i, 0)),   # x: batch-tiled, pipelined
            resident((F_IN, H1_PAD)), resident((1, H1_PAD)),
            resident((H1_PAD, H2_PAD)), resident((1, H2_PAD)),
            resident((H2_PAD, F_OUT)), resident((1, F_OUT)),
        ],
        out_specs=pl.BlockSpec((block_b, F_OUT), lambda i: (i, 0)),
        compiler_params=pltpu.CompilerParams(
            dimension_semantics=("parallel",)),                # 2-TC sharding on v7x
    )(x, w1, t1, w2, t2, w3, t3)


def linear_mlp_forward(x, params):
    """x: (B, 10) float32 -> (B, 2) float32 (eval-mode forward of the PyTorch module)."""
    B = x.shape[0]
    block_b, chunk = _choose_tiles(B)
    return _mlp_call(x,
                     params["w1"], params["t1"],
                     params["w2"], params["t2"],
                     params["w3"], params["t3"],
                     block_b=block_b, chunk=chunk)


def reference_forward(x, params):
    """Pure-JAX reference with the same bf16-quantized inputs/weights (f32 math)."""
    xb = x.astype(jnp.bfloat16).astype(jnp.float32)
    w1 = params["w1"].astype(jnp.float32)
    w2 = params["w2"].astype(jnp.float32)
    w3 = params["w3"].astype(jnp.float32)
    h = jnp.maximum(xb @ w1 + params["t1"], 0.0)
    h = h.astype(jnp.bfloat16).astype(jnp.float32)
    h = jnp.maximum(h @ w2 + params["t2"], 0.0)
    h = h.astype(jnp.bfloat16).astype(jnp.float32)
    return jnp.tanh(h @ w3 + params["t3"])


if __name__ == "__main__":
    key = jax.random.PRNGKey(0)
    pkey, xkey1, xkey2 = jax.random.split(key, 3)
    params = make_params(pkey)

    # Small batch (matches nn.Linear(10, 240) input dim): single grid step / chunk.
    x_small = jax.random.normal(xkey1, (8, F_IN), jnp.float32)
    out_small = jax.block_until_ready(linear_mlp_forward(x_small, params))
    assert out_small.shape == (8, F_OUT) and out_small.dtype == jnp.float32
    ref_small = reference_forward(x_small, params)
    assert jnp.allclose(out_small, ref_small, atol=5e-3, rtol=1e-3), (out_small, ref_small)

    # Mid-size batch: 2 grid steps, inner sub-chunk loop, ragged tail (discarded writes).
    x_mid = jax.random.normal(xkey2, (1040, F_IN), jnp.float32)
    out_mid = jax.block_until_ready(linear_mlp_forward(x_mid, params))
    ref_mid = reference_forward(x_mid, params)
    assert out_mid.shape == (1040, F_OUT)
    assert jnp.allclose(out_mid, ref_mid, atol=5e-3, rtol=1e-3)

    print("KERNEL_OK")
</pallas_src>

<mosaic_0001>
module attributes {stable_mosaic.version = 11 : i64} {
  func.func @mlp_kernel(%arg0: i32, %arg1: memref<8x10xf32, #tpu.memory_space<vmem>>, %arg2: memref<10x256xbf16, #tpu.memory_space<vmem>>, %arg3: memref<1x256xf32, #tpu.memory_space<vmem>>, %arg4: memref<256x128xbf16, #tpu.memory_space<vmem>>, %arg5: memref<1x128xf32, #tpu.memory_space<vmem>>, %arg6: memref<128x2xbf16, #tpu.memory_space<vmem>>, %arg7: memref<1x2xf32, #tpu.memory_space<vmem>>, %arg8: memref<8x2xf32, #tpu.memory_space<vmem>>) attributes {dimension_semantics = [#tpu.dimension_semantics<parallel>], iteration_bounds = array<i64: 1>, scalar_prefetch = 0 : i64, scratch_operands = 0 : i64, tpu.core_type = #tpu.core_type<tc>, window_params = [{transform_indices = @transform_0, window_bounds = array<i64: 8, 10>}, {pipeline_mode = #tpu.pipeline_mode<synchronous>, transform_indices = @transform_1, window_bounds = array<i64: 10, 256>}, {pipeline_mode = #tpu.pipeline_mode<synchronous>, transform_indices = @transform_2, window_bounds = array<i64: 1, 256>}, {pipeline_mode = #tpu.pipeline_mode<synchronous>, transform_indices = @transform_3, window_bounds = array<i64: 256, 128>}, {pipeline_mode = #tpu.pipeline_mode<synchronous>, transform_indices = @transform_4, window_bounds = array<i64: 1, 128>}, {pipeline_mode = #tpu.pipeline_mode<synchronous>, transform_indices = @transform_5, window_bounds = array<i64: 128, 2>}, {pipeline_mode = #tpu.pipeline_mode<synchronous>, transform_indices = @transform_6, window_bounds = array<i64: 1, 2>}, {transform_indices = @transform_7, window_bounds = array<i64: 8, 2>}]} {
    %c0_i32 = arith.constant 0 : i32
    %c8_i32 = arith.constant 8 : i32
    %0 = arith.muli %c0_i32, %c8_i32 : i32
    %1 = tpu.assume_multiple %0, 8 : i32
    %2 = arith.index_cast %1 : i32 to index
    %c0 = arith.constant 0 : index
    %3 = vector.load %arg1[%2, %c0] : memref<8x10xf32, #tpu.memory_space<vmem>>, vector<8x10xf32>
    %4 = arith.truncf %3 : vector<8x10xf32> to vector<8x10xbf16>
    %c0_0 = arith.constant 0 : index
    %c0_1 = arith.constant 0 : index
    %5 = vector.load %arg2[%c0_0, %c0_1] : memref<10x256xbf16, #tpu.memory_space<vmem>>, vector<10x256xbf16>
    %cst = arith.constant dense<0.000000e+00> : vector<8x256xf32>
    %6 = tpu.matmul %4, %5, %cst {dimension_numbers = #tpu.dot_dimension_numbers<[1], [0], [0], [1], [0, 0, 1, 1], [], []>} : vector<8x10xbf16>, vector<10x256xbf16>, vector<8x256xf32> -> vector<8x256xf32>
    %c0_2 = arith.constant 0 : index
    %c0_3 = arith.constant 0 : index
    %7 = vector.load %arg3[%c0_2, %c0_3] : memref<1x256xf32, #tpu.memory_space<vmem>>, vector<1x256xf32>
    %8 = vector.broadcast %7 : vector<1x256xf32> to vector<8x256xf32>
    %9 = arith.addf %6, %8 : vector<8x256xf32>
    %cst_4 = arith.constant 0.000000e+00 : f32
    %10 = vector.broadcast %cst_4 : f32 to vector<8x256xf32>
    %11 = arith.maximumf %9, %10 : vector<8x256xf32>
    %12 = arith.truncf %11 : vector<8x256xf32> to vector<8x256xbf16>
    %c0_5 = arith.constant 0 : index
    %c0_6 = arith.constant 0 : index
    %13 = vector.load %arg4[%c0_5, %c0_6] : memref<256x128xbf16, #tpu.memory_space<vmem>>, vector<256x128xbf16>
    %cst_7 = arith.constant dense<0.000000e+00> : vector<8x128xf32>
    %14 = tpu.matmul %12, %13, %cst_7 {dimension_numbers = #tpu.dot_dimension_numbers<[1], [0], [0], [1], [0, 0, 1, 1], [], []>} : vector<8x256xbf16>, vector<256x128xbf16>, vector<8x128xf32> -> vector<8x128xf32>
    %c0_8 = arith.constant 0 : index
    %c0_9 = arith.constant 0 : index
    %15 = vector.load %arg5[%c0_8, %c0_9] : memref<1x128xf32, #tpu.memory_space<vmem>>, vector<1x128xf32>
    %16 = vector.broadcast %15 : vector<1x128xf32> to vector<8x128xf32>
    %17 = arith.addf %14, %16 : vector<8x128xf32>
    %cst_10 = arith.constant 0.000000e+00 : f32
    %18 = vector.broadcast %cst_10 : f32 to vector<8x128xf32>
    %19 = arith.maximumf %17, %18 : vector<8x128xf32>
    %20 = arith.truncf %19 : vector<8x128xf32> to vector<8x128xbf16>
    %c0_11 = arith.constant 0 : index
    %c0_12 = arith.constant 0 : index
    %21 = vector.load %arg6[%c0_11, %c0_12] : memref<128x2xbf16, #tpu.memory_space<vmem>>, vector<128x2xbf16>
    %cst_13 = arith.constant dense<0.000000e+00> : vector<8x2xf32>
    %22 = tpu.matmul %20, %21, %cst_13 {dimension_numbers = #tpu.dot_dimension_numbers<[1], [0], [0], [1], [0, 0, 1, 1], [], []>} : vector<8x128xbf16>, vector<128x2xbf16>, vector<8x2xf32> -> vector<8x2xf32>
    %c0_14 = arith.constant 0 : index
    %c0_15 = arith.constant 0 : index
    %23 = vector.load %arg7[%c0_14, %c0_15] : memref<1x2xf32, #tpu.memory_space<vmem>>, vector<1x2xf32>
    %24 = vector.broadcast %23 : vector<1x2xf32> to vector<8x2xf32>
    %25 = arith.addf %22, %24 : vector<8x2xf32>
    %26 = math.tanh %25 : vector<8x2xf32>
    %27 = arith.index_cast %1 : i32 to index
    %c0_16 = arith.constant 0 : index
    %28 = vector.load %arg8[%27, %c0_16] : memref<8x2xf32, #tpu.memory_space<vmem>>, vector<8x2xf32>
    tpu.vector_store %arg8[%27, %c0_16], %26 {strides = array<i32>} : memref<8x2xf32, #tpu.memory_space<vmem>>, vector<8x2xf32>,
    %c1_i32 = arith.constant 1 : i32
    return
  }
  func.func @transform_0(%arg0: i32) -> (i32, i32) {
    %c0_i32 = arith.constant 0 : i32
    %c0_i32_0 = arith.constant 0 : i32
    return %arg0, %c0_i32 : i32, i32
  }
  func.func @transform_1(%arg0: i32) -> (i32, i32) {
    %c0_i32 = arith.constant 0 : i32
    %c0_i32_0 = arith.constant 0 : i32
    %c0_i32_1 = arith.constant 0 : i32
    return %c0_i32, %c0_i32_0 : i32, i32
  }
  func.func @transform_2(%arg0: i32) -> (i32, i32) {
    %c0_i32 = arith.constant 0 : i32
    %c0_i32_0 = arith.constant 0 : i32
    %c0_i32_1 = arith.constant 0 : i32
    return %c0_i32, %c0_i32_0 : i32, i32
  }
  func.func @transform_3(%arg0: i32) -> (i32, i32) {
    %c0_i32 = arith.constant 0 : i32
    %c0_i32_0 = arith.constant 0 : i32
    %c0_i32_1 = arith.constant 0 : i32
    return %c0_i32, %c0_i32_0 : i32, i32
  }
  func.func @transform_4(%arg0: i32) -> (i32, i32) {
    %c0_i32 = arith.constant 0 : i32
    %c0_i32_0 = arith.constant 0 : i32
    %c0_i32_1 = arith.constant 0 : i32
    return %c0_i32, %c0_i32_0 : i32, i32
  }
  func.func @transform_5(%arg0: i32) -> (i32, i32) {
    %c0_i32 = arith.constant 0 : i32
    %c0_i32_0 = arith.constant 0 : i32
    %c0_i32_1 = arith.constant 0 : i32
    return %c0_i32, %c0_i32_0 : i32, i32
  }
  func.func @transform_6(%arg0: i32) -> (i32, i32) {
    %c0_i32 = arith.constant 0 : i32
    %c0_i32_0 = arith.constant 0 : i32
    %c0_i32_1 = arith.constant 0 : i32
    return %c0_i32, %c0_i32_0 : i32, i32
  }
  func.func @transform_7(%arg0: i32) -> (i32, i32) {
    %c0_i32 = arith.constant 0 : i32
    %c0_i32_0 = arith.constant 0 : i32
    return %arg0, %c0_i32 : i32, i32
  }
}

</mosaic_0001>

<llo_original>
// kernel: _mlp_call.1
$region0: #{_mlp_call.1}
  #allocation0 [shape = 'u32[]', space=smem, size = 0x4, offset = 0x4, fixed_abs, tag = 'smem constant byte address 0x4 - core index']
  #allocation1 [shape = 'u32[144,128]{1,0:T(1,128)}', space=vmem, size = 0x12000, scoped, tag = 'internal scratch']
  %s0 = inlined_call_operand.vmem [shape: f32[8,10], index: 0, kind: input, shape index: {}]
  %s1 = inlined_call_operand.vmem [shape: bf16[10,256], index: 1, kind: input, shape index: {}]
  %s2 = inlined_call_operand.vmem [shape: f32[1,256], index: 2, kind: input, shape index: {}]
  %s3 = inlined_call_operand.hbm [shape: bf16[256,128], index: 3, kind: input, shape index: {}]
  %s4 = inlined_call_operand.vmem [shape: f32[1,128], index: 4, kind: input, shape index: {}]
  %s5 = inlined_call_operand.vmem [shape: bf16[128,2], index: 5, kind: input, shape index: {}]
  %s6 = inlined_call_operand.vmem [shape: f32[1,2], index: 6, kind: input, shape index: {}]
  %s7 = inlined_call_operand.vmem [shape: f32[8,2], index: 7, kind: output, shape index: {}]
  %s8 = sld [smem:[#allocation0]]
  $region42: #{_mlp_call.1} parent=0
    _
  %s10 = ssub.s32 1, %s8
  %s11 = scalar_select 0, %s10, %s8
  $region1: #{_mlp_call.1} parent=0
    #allocation2 [shape = 'u8[65536]{0}', space=vmem, size = 0x10000, scoped, tag = 'input window, operand 3, single buffered']
    #allocation3 [shape = 's32[1]{0}', space=sflag, size = 0x4, scoped, tag = 'scoped memory for _mlp_call.1']
    %12 = vsyncpa [#allocation3], 0
    // Predicated region
    $region2: #{_mlp_call.1} parent=1 // pred_check
      _
    $region3: #{_mlp_call.1} parent=1 // pred_check_branch
      %14 = sbr.rel (0) target = $region5
    $region4: #{_mlp_call.1} parent=1 // pred_region
      _
    $region5: #{_mlp_call.1} parent=1 // pred_fallthru
      _
    // Predicated region
    $region6: #{_mlp_call.1} parent=1 // pred_check
      _
    $region7: #{_mlp_call.1} parent=1 // pred_check_branch
      %16 = sbr.rel (0) target = $region9
    $region8: #{_mlp_call.1} parent=1 // pred_region
      _
    $region9: #{_mlp_call.1} parent=1 // pred_fallthru
      _
    // Predicated region
    $region10: #{_mlp_call.1} parent=1 // pred_check
      _
    $region11: #{_mlp_call.1} parent=1 // pred_check_branch
      %18 = sbr.rel (0) target = $region13
    $region12: #{_mlp_call.1} parent=1 // pred_region
      _
    $region13: #{_mlp_call.1} parent=1 // pred_fallthru
      _
    // Predicated region
    $region14: #{_mlp_call.1} parent=1 // pred_check
      _
    $region15: #{_mlp_call.1} parent=1 // pred_check_branch
      %20 = sbr.rel (0) target = $region17
    $region16: #{_mlp_call.1} parent=1 // pred_region
      %s22 = ssub.s32 2048, 2048
      %23 = vsyncadd [#allocation3], %s22
      %s24 = sshll.u32 [#allocation2], 4
      %s25 = int_to_ptr.vmem [resolvable:$true] %s24
      %30 = dma.hbm_to_vmem [thread:$0]  %s3, 2048, %s25, [#allocation3], 64, 64, 4
    $region17: #{_mlp_call.1} parent=1 // pred_fallthru
      _
    // Predicated region
    $region18: #{_mlp_call.1} parent=1 // pred_check
      _
    $region19: #{_mlp_call.1} parent=1 // pred_check_branch
      %32 = sbr.rel (0) target = $region21
    $region20: #{_mlp_call.1} parent=1 // pred_region
      _
    $region21: #{_mlp_call.1} parent=1 // pred_fallthru
      _
    // Predicated region
    $region22: #{_mlp_call.1} parent=1 // pred_check
      _
    $region23: #{_mlp_call.1} parent=1 // pred_check_branch
      %34 = sbr.rel (0) target = $region25
    $region24: #{_mlp_call.1} parent=1 // pred_region
      _
    $region25: #{_mlp_call.1} parent=1 // pred_fallthru
      _
    // Predicated region
    $region26: #{_mlp_call.1} parent=1 // pred_check
      _
    $region27: #{_mlp_call.1} parent=1 // pred_check_branch
      %36 = sbr.rel (0) target = $region29
    $region28: #{_mlp_call.1} parent=1 // pred_region
      _
    $region29: #{_mlp_call.1} parent=1 // pred_fallthru
      _
    // Predicated region
    $region30: #{_mlp_call.1} parent=1 // pred_check
      _
    $region31: #{_mlp_call.1} parent=1 // pred_check_branch
      %38 = sbr.rel (0) target = $region33
    $region32: #{_mlp_call.1} parent=1 // pred_region
      %39 = dma.done [#allocation3], 2048
    $region33: #{_mlp_call.1} parent=1 // pred_fallthru
      _
    %v41 = vld [vmem:[%s0] sm:$0xff]
    %v42 = vpack.c.bf16 %v41, %v41
    %v43 = vld [vmem:[%s1] sm:$0xff]
    %v44 = vld [vmem:[%s1 + $0x8] sm:$0x11]
    %v45 = vld [vmem:[%s2] sm:$0x3]
    %v47 = vlaneseq
    %v48 = vshrl.u32 %v47, 7
    %v49 = vsub.s32 0, %v48
    %v50 = vrot.slane %v45, %v49
    %v51 = vlaneseq
    %v52 = vshrl.u32 %v51, 7
    %v53 = vsub.s32 1, %v52
    %v54 = vrot.slane %v45, %v53
    %v59 = vunpack.c.l.b16 %v43
    %v60 = vunpack.c.h.b16 %v43
    %v61 = vunpack.c.l.b16 %v44
    %v62 = vunpack.c.h.b16 %v44
    %v63 = vpack.c.b16 %v61, %v59
    %v64 = vpack.c.b16 %v62, %v60
    %vm65 = vcmask 80896
    %v67 = vsel %vm65, %v42, 0
    %vm69 = vcmask 1044480
    %v71 = vsel %vm69, %v63, 0
    %v74 = vsel %vm69, %v64, 0
    %76 = vmatprep.subr.bf16.mxu0 %v74
    %77 = vmatpush1.bf16.msra.mxu0 %v71
    %78 = vmatprep.subr.bf16.mxu0 0
    %79 = vmatpush1.bf16.msra.mxu0 0
    %80 = vmatprep.subr.bf16.mxu0 0
    %81 = vmatpush1.bf16.msra.mxu0 0
    %82 = vmatprep.subr.bf16.mxu0 0
    %83 = vmatpush1.bf16.msra.mxu0 0
    %84 = vmatprep.subr.bf16.mxu0 0
    %85 = vmatpush1.bf16.msra.mxu0 0
    %86 = vmatprep.subr.bf16.mxu0 0
    %87 = vmatpush1.bf16.msra.mxu0 0
    %88 = vmatprep.subr.bf16.mxu0 0
    %89 = vmatpush1.bf16.msra.mxu0 0
    %90 = vmatprep.subr.bf16.mxu0 0
    %91 = vmatpush1.bf16.msra.mxu0 0
    %92 = vmatprep.subr.bf16.mxu0 0
    %93 = vmatpush1.bf16.msra.mxu0 0
    %94 = vmatprep.subr.bf16.mxu0 0
    %95 = vmatpush1.bf16.msra.mxu0 0
    %96 = vmatprep.subr.bf16.mxu0 0
    %97 = vmatpush1.bf16.msra.mxu0 0
    %98 = vmatprep.subr.bf16.mxu0 0
    %99 = vmatpush1.bf16.msra.mxu0 0
    %100 = vmatprep.subr.bf16.mxu0 0
    %101 = vmatpush1.bf16.msra.mxu0 0
    %102 = vmatprep.subr.bf16.mxu0 0
    %103 = vmatpush1.bf16.msra.mxu0 0
    %104 = vmatprep.subr.bf16.mxu0 0
    %105 = vmatpush1.bf16.msra.mxu0 0
    %106 = vmatprep.subr.bf16.mxu0 0
    %107 = vmatpush1.bf16.msra.mxu0 0
    %108 = vmatprep.mubr.bf16.mxu0 0
    %109 = vmatmul.mubr.bf16.gmra.mrb[0].mxu0 %v67
    %v110 = vpop.f32.mrb[0].mxu0
    %v111 = vadd.f32 %v50, %v110
    %v112 = vpop.f32.mrb[0].mxu0
    %v113 = vadd.f32 %v54, %v112
    %v114 = vpop.f32.mrb[0].mxu0
    %v115 = vpop.f32.mrb[0].mxu0
    %116 = vdwg.mxu0
    %v117 = vmax.f32 %v111, 0.0
    %v118 = vmax.f32 %v113, 0.0
    %v119 = vpack.c.bf16 %v117, %v117
    %v120 = vpack.c.bf16 %v118, %v118
    %v121 = vld [vmem:[#allocation2] sm:$0xf]
    %v122 = vld [vmem:[#allocation2 + $0x4] sm:$0xf]
    %v123 = vld [vmem:[#allocation2 + $0x8] sm:$0xf]
    %v124 = vld [vmem:[#allocation2 + $0xc] sm:$0xf]
    %v125 = vld [vmem:[#allocation2 + $0x10] sm:$0xf]
    %v126 = vld [vmem:[#allocation2 + $0x14] sm:$0xf]
    %v127 = vld [vmem:[#allocation2 + $0x18] sm:$0xf]
    %v128 = vld [vmem:[#allocation2 + $0x1c] sm:$0xf]
    %v129 = vld [vmem:[#allocation2 + $0x20] sm:$0xf]
    %v130 = vld [vmem:[#allocation2 + $0x24] sm:$0xf]
    %v131 = vld [vmem:[#allocation2 + $0x28] sm:$0xf]
    %v132 = vld [vmem:[#allocation2 + $0x2c] sm:$0xf]
    %v133 = vld [vmem:[#allocation2 + $0x30] sm:$0xf]
    %v134 = vld [vmem:[#allocation2 + $0x34] sm:$0xf]
    %v135 = vld [vmem:[#allocation2 + $0x38] sm:$0xf]
    %v136 = vld [vmem:[#allocation2 + $0x3c] sm:$0xf]
    %v137 = vld [vmem:[#allocation2 + $0x40] sm:$0xf]
    %v138 = vld [vmem:[#allocation2 + $0x44] sm:$0xf]
    %v139 = vld [vmem:[#allocation2 + $0x48] sm:$0xf]
    %v140 = vld [vmem:[#allocation2 + $0x4c] sm:$0xf]
    %v141 = vld [vmem:[#allocation2 + $0x50] sm:$0xf]
    %v142 = vld [vmem:[#allocation2 + $0x54] sm:$0xf]
    %v143 = vld [vmem:[#allocation2 + $0x58] sm:$0xf]
    %v144 = vld [vmem:[#allocation2 + $0x5c] sm:$0xf]
    %v145 = vld [vmem:[#allocation2 + $0x60] sm:$0xf]
    %v146 = vld [vmem:[#allocation2 + $0x64] sm:$0xf]
    %v147 = vld [vmem:[#allocation2 + $0x68] sm:$0xf]
    %v148 = vld [vmem:[#allocation2 + $0x6c] sm:$0xf]
    %v149 = vld [vmem:[#allocation2 + $0x70] sm:$0xf]
    %v150 = vld [vmem:[#allocation2 + $0x74] sm:$0xf]
    %v151 = vld [vmem:[#allocation2 + $0x78] sm:$0xf]
    %v152 = vld [vmem:[#allocation2 + $0x7c] sm:$0xf]
    %v153 = vld [vmem:[%s4] sm:$0x1]
    %v155 = vlaneseq
    %v156 = vshrl.u32 %v155, 7
    %v157 = vsub.s32 0, %v156
    %v158 = vrot.slane %v153, %v157
    %v192 = vunpack.c.l.b16 %v121
    %v193 = vunpack.c.l.b16 %v122
    %v194 = vunpack.c.l.b16 %v123
    %v195 = vunpack.c.l.b16 %v124
    %v196 = vunpack.c.l.b16 %v125
    %v197 = vunpack.c.l.b16 %v126
    %v198 = vunpack.c.l.b16 %v127
    %v199 = vunpack.c.l.b16 %v128
    %v200 = vunpack.c.l.b16 %v129
    %v201 = vunpack.c.l.b16 %v130
    %v202 = vunpack.c.l.b16 %v131
    %v203 = vunpack.c.l.b16 %v132
    %v204 = vunpack.c.l.b16 %v133
    %v205 = vunpack.c.l.b16 %v134
    %v206 = vunpack.c.l.b16 %v135
    %v207 = vunpack.c.l.b16 %v136
    %v208 = vunpack.c.l.b16 %v137
    %v209 = vunpack.c.l.b16 %v138
    %v210 = vunpack.c.l.b16 %v139
    %v211 = vunpack.c.l.b16 %v140
    %v212 = vunpack.c.l.b16 %v141
    %v213 = vunpack.c.l.b16 %v142
    %v214 = vunpack.c.l.b16 %v143
    %v215 = vunpack.c.l.b16 %v144
    %v216 = vunpack.c.l.b16 %v145
    %v217 = vunpack.c.l.b16 %v146
    %v218 = vunpack.c.l.b16 %v147
    %v219 = vunpack.c.l.b16 %v148
    %v220 = vunpack.c.l.b16 %v149
    %v221 = vunpack.c.l.b16 %v150
    %v222 = vunpack.c.l.b16 %v151
    %v223 = vunpack.c.l.b16 %v152
    %v224 = vpack.c.b16 %v193, %v192
    %v225 = vpack.c.b16 %v195, %v194
    %v226 = vpack.c.b16 %v197, %v196
    %v227 = vpack.c.b16 %v199, %v198
    %v228 = vpack.c.b16 %v201, %v200
    %v229 = vpack.c.b16 %v203, %v202
    %v230 = vpack.c.b16 %v205, %v204
    %v231 = vpack.c.b16 %v207, %v206
    %v232 = vpack.c.b16 %v209, %v208
    %v233 = vpack.c.b16 %v211, %v210
    %v234 = vpack.c.b16 %v213, %v212
    %v235 = vpack.c.b16 %v215, %v214
    %v236 = vpack.c.b16 %v217, %v216
    %v237 = vpack.c.b16 %v219, %v218
    %v238 = vpack.c.b16 %v221, %v220
    %v239 = vpack.c.b16 %v223, %v222
    %256 = vmatprep.subr.bf16.mxu0 0
    %257 = vmatpush1.bf16.msra.mxu0 %v224
    %258 = vmatprep.subr.bf16.mxu0 0
    %259 = vmatpush1.bf16.msra.mxu0 %v225
    %260 = vmatprep.subr.bf16.mxu0 0
    %261 = vmatpush1.bf16.msra.mxu0 %v226
    %262 = vmatprep.subr.bf16.mxu0 0
    %263 = vmatpush1.bf16.msra.mxu0 %v227
    %264 = vmatprep.subr.bf16.mxu0 0
    %265 = vmatpush1.bf16.msra.mxu0 %v228
    %266 = vmatprep.subr.bf16.mxu0 0
    %267 = vmatpush1.bf16.msra.mxu0 %v229
    %268 = vmatprep.subr.bf16.mxu0 0
    %269 = vmatpush1.bf16.msra.mxu0 %v230
    %270 = vmatprep.subr.bf16.mxu0 0
    %271 = vmatpush1.bf16.msra.mxu0 %v231
    %272 = vmatprep.subr.bf16.mxu0 0
    %273 = vmatpush1.bf16.msra.mxu0 %v232
    %274 = vmatprep.subr.bf16.mxu0 0
    %275 = vmatpush1.bf16.msra.mxu0 %v233
    %276 = vmatprep.subr.bf16.mxu0 0
    %277 = vmatpush1.bf16.msra.mxu0 %v234
    %278 = vmatprep.subr.bf16.mxu0 0
    %279 = vmatpush1.bf16.msra.mxu0 %v235
    %280 = vmatprep.subr.bf16.mxu0 0
    %281 = vmatpush1.bf16.msra.mxu0 %v236
    %282 = vmatprep.subr.bf16.mxu0 0
    %283 = vmatpush1.bf16.msra.mxu0 %v237
    %284 = vmatprep.subr.bf16.mxu0 0
    %285 = vmatpush1.bf16.msra.mxu0 %v238
    %286 = vmatprep.subr.bf16.mxu0 0
    %287 = vmatpush1.bf16.msra.mxu0 %v239
    %288 = vmatprep.mubr.bf16.mxu0 %v120
    %289 = vmatmul.mubr.bf16.gmra.mrb[0].mxu0 %v119
    %v290 = vpop.f32.mrb[0].mxu0
    %v291 = vadd.f32 %v158, %v290
    %v292 = vpop.f32.mrb[0].mxu0
    %v293 = vpop.f32.mrb[0].mxu0
    %v294 = vpop.f32.mrb[0].mxu0
    %295 = vdwg.mxu0
    %v296 = vmax.f32 %v291, 0.0
    %v297 = vpack.c.bf16 %v296, %v296
    %v298 = vld [vmem:[%s5] sm:$0xf]
    %v299 = vld [vmem:[%s5 + $0x4] sm:$0xf]
    %v300 = vld [vmem:[%s5 + $0x8] sm:$0xf]
    %v301 = vld [vmem:[%s5 + $0xc] sm:$0xf]
    %v302 = vld [vmem:[%s5 + $0x10] sm:$0xf]
    %v303 = vld [vmem:[%s5 + $0x14] sm:$0xf]
    %v304 = vld [vmem:[%s5 + $0x18] sm:$0xf]
    %v305 = vld [vmem:[%s5 + $0x1c] sm:$0xf]
    %v306 = vld [vmem:[%s5 + $0x20] sm:$0xf]
    %v307 = vld [vmem:[%s5 + $0x24] sm:$0xf]
    %v308 = vld [vmem:[%s5 + $0x28] sm:$0xf]
    %v309 = vld [vmem:[%s5 + $0x2c] sm:$0xf]
    %v310 = vld [vmem:[%s5 + $0x30] sm:$0xf]
    %v311 = vld [vmem:[%s5 + $0x34] sm:$0xf]
    %v312 = vld [vmem:[%s5 + $0x38] sm:$0xf]
    %v313 = vld [vmem:[%s5 + $0x3c] sm:$0xf]
    %v314 = vld [vmem:[%s6] sm:$0x1]
    %v316 = vlaneseq
    %v317 = vshrl.u32 %v316, 7
    %v318 = vsub.s32 0, %v317
    %v319 = vrot.slane %v314, %v318
    %v337 = vunpack.c.l.b16 %v298
    %v338 = vunpack.c.l.b16 %v299
    %v339 = vunpack.c.l.b16 %v300
    %v340 = vunpack.c.l.b16 %v301
    %v341 = vunpack.c.l.b16 %v302
    %v342 = vunpack.c.l.b16 %v303
    %v343 = vunpack.c.l.b16 %v304
    %v344 = vunpack.c.l.b16 %v305
    %v345 = vunpack.c.l.b16 %v306
    %v346 = vunpack.c.l.b16 %v307
    %v347 = vunpack.c.l.b16 %v308
    %v348 = vunpack.c.l.b16 %v309
    %v349 = vunpack.c.l.b16 %v310
    %v350 = vunpack.c.l.b16 %v311
    %v351 = vunpack.c.l.b16 %v312
    %v352 = vunpack.c.l.b16 %v313
    %v353 = vpack.c.b16 %v338, %v337
    %v354 = vpack.c.b16 %v340, %v339
    %v355 = vpack.c.b16 %v342, %v341
    %v356 = vpack.c.b16 %v344, %v343
    %v357 = vpack.c.b16 %v346, %v345
    %v358 = vpack.c.b16 %v348, %v347
    %v359 = vpack.c.b16 %v350, %v349
    %v360 = vpack.c.b16 %v352, %v351
    %369 = vmatprep.subr.bf16.mxu0 0
    %370 = vmatpush1.bf16.msra.mxu0 %v353
    %371 = vmatprep.subr.bf16.mxu0 0
    %372 = vmatpush1.bf16.msra.mxu0 %v354
    %373 = vmatprep.subr.bf16.mxu0 0
    %374 = vmatpush1.bf16.msra.mxu0 %v355
    %375 = vmatprep.subr.bf16.mxu0 0
    %376 = vmatpush1.bf16.msra.mxu0 %v356
    %377 = vmatprep.subr.bf16.mxu0 0
    %378 = vmatpush1.bf16.msra.mxu0 %v357
    %379 = vmatprep.subr.bf16.mxu0 0
    %380 = vmatpush1.bf16.msra.mxu0 %v358
    %381 = vmatprep.subr.bf16.mxu0 0
    %382 = vmatpush1.bf16.msra.mxu0 %v359
    %383 = vmatprep.subr.bf16.mxu0 0
    %384 = vmatpush1.bf16.msra.mxu0 %v360
    %385 = vmatprep.subr.bf16.mxu0 0
    %386 = vmatpush1.bf16.msra.mxu0 0
    %387 = vmatprep.subr.bf16.mxu0 0
    %388 = vmatpush1.bf16.msra.mxu0 0
    %389 = vmatprep.subr.bf16.mxu0 0
    %390 = vmatpush1.bf16.msra.mxu0 0
    %391 = vmatprep.subr.bf16.mxu0 0
    %392 = vmatpush1.bf16.msra.mxu0 0
    %393 = vmatprep.subr.bf16.mxu0 0
    %394 = vmatpush1.bf16.msra.mxu0 0
    %395 = vmatprep.subr.bf16.mxu0 0
    %396 = vmatpush1.bf16.msra.mxu0 0
    %397 = vmatprep.subr.bf16.mxu0 0
    %398 = vmatpush1.bf16.msra.mxu0 0
    %399 = vmatprep.subr.bf16.mxu0 0
    %400 = vmatpush1.bf16.msra.mxu0 0
    %401 = vmatprep.mubr.bf16.mxu0 0
    %402 = vmatmul.mubr.bf16.gmra.mrb[0].mxu0 %v297
    %v403 = vpop.f32.mrb[0].mxu0
    %v404 = vadd.f32 %v319, %v403
    %v405 = vpop.f32.mrb[0].mxu0
    %v406 = vpop.f32.mrb[0].mxu0
    %v407 = vpop.f32.mrb[0].mxu0
    %408 = vdwg.mxu0
    %v409 = vtanh.pop %v404
    %vm410 = vcmask 15360
    %411 = vst.msk [vmem:[%s7] sm:$0xff] %vm410, %v409
    // Predicated region
    $region34: #{_mlp_call.1} parent=1 // pred_check
      _
    $region35: #{_mlp_call.1} parent=1 // pred_check_branch
      %413 = sbr.rel (0) target = $region37
    $region36: #{_mlp_call.1} parent=1 // pred_region
      _
    $region37: #{_mlp_call.1} parent=1 // pred_fallthru
      _
    // Predicated region
    $region38: #{_mlp_call.1} parent=1 // pred_check
      _
    $region39: #{_mlp_call.1} parent=1 // pred_check_branch
      %415 = sbr.rel (0) target = $region41
    $region40: #{_mlp_call.1} parent=1 // pred_region
      _
    $region41: #{_mlp_call.1} parent=1 // pred_fallthru
      _
    %416 = vsyncpa [#allocation3], 1

</llo_original>
